<compile_context>
chip_gen: v6e
topology: v6e:2x2x1
jax: 0.10.0
libtpu: 0.0.40
codegen_flags: <defaults>
</compile_context>

<pallas_src>
import math
import numpy as np

import jax
import jax.numpy as jnp
from jax.experimental import pallas as pl
from jax.experimental.pallas import tpu as pltpu

_SWISH_RESCALE = 1.679177        # e3nn rescaled_act.swish second-moment rescale
_LANE = 128
_VMEM_LIMIT = 32 * 1024 * 1024   # explicit scoped-VMEM limit (raises v5e's 16 MiB default)


def _ceil_to(x, m):
    return ((x + m - 1) // m) * m


def _row_tile(n, cap=512):
    t = 128
    while t * 2 <= cap and t * 2 <= n:
        t *= 2
    return t


# --------------------------------------------------------------------------------------
# Setup: real spherical harmonics sampled on the S2 grid (plain numpy, deterministic)
# --------------------------------------------------------------------------------------
def _assoc_legendre(lmax, x):
    P = {(0, 0): np.ones_like(x)}
    for m in range(1, lmax + 1):
        P[(m, m)] = -(2 * m - 1) * np.sqrt(np.maximum(1.0 - x * x, 0.0)) * P[(m - 1, m - 1)]
    for m in range(0, lmax):
        P[(m + 1, m)] = (2 * m + 1) * x * P[(m, m)]
    for m in range(0, lmax + 1):
        for l in range(m + 2, lmax + 1):
            P[(l, m)] = ((2 * l - 1) * x * P[(l - 1, m)] - (l + m - 1) * P[(l - 2, m)]) / (l - m)
    return P


def _real_sph_harm_matrix(lmax, betas, alphas):
    """Y[(l,m), grid] with m ordered -l..l inside each l (e3nn convention)."""
    P = _assoc_legendre(lmax, np.cos(betas))
    rows = []
    for l in range(lmax + 1):
        for m in range(-l, l + 1):
            am = abs(m)
            norm = math.sqrt((2 * l + 1) / (4.0 * math.pi)
                             * math.factorial(l - am) / math.factorial(l + am))
            plm = norm * P[(l, am)]                                   # [res_beta]
            if m > 0:
                ang = math.sqrt(2.0) * np.cos(m * alphas)
            elif m < 0:
                ang = math.sqrt(2.0) * np.sin(am * alphas)
            else:
                ang = np.ones_like(alphas)
            rows.append(plm[:, None] * ang[None, :])                  # [res_beta, res_alpha]
    Y = np.stack(rows, axis=0)
    return Y.reshape(Y.shape[0], -1)                                  # [(lmax+1)^2, G]


def make_s2grid_mats(lmax, res):
    betas = (np.arange(res) + 0.5) / res * math.pi
    alphas = np.arange(res) / res * 2.0 * math.pi
    yto = _real_sph_harm_matrix(lmax, betas, alphas)                  # [da, G]
    yfrom = np.linalg.pinv(yto)                                       # [G, da]
    return jnp.asarray(yto, jnp.float32), jnp.asarray(yfrom, jnp.float32)


# --------------------------------------------------------------------------------------
# Pallas kernel 1: LearnableTensorSquare  out[n,k] = sum_{a,b} x[n,a] x[n,b] W[a,b,k]
#   Single MXU matmul:  z[n, a*Dp+b] = x[n,a]*x[n,b]  (VPU, VMEM scratch),  out = z @ Wflat
# --------------------------------------------------------------------------------------
def _tensor_square_kernel(x_ref, w_ref, o_ref, z_ref):
    x = x_ref[...]                                                    # [TN, Dp]  f32
    dp = x.shape[1]
    for a in range(dp):                                               # static; Dp <= 40
        z_ref[:, a * dp:(a + 1) * dp] = x[:, a:a + 1] * x             # pairwise products
    o_ref[...] = jnp.dot(z_ref[...].astype(jnp.bfloat16), w_ref[...],
                         preferred_element_type=jnp.float32)          # [TN, Kp] lane-dense


def tensor_square(xp, wq_flat):
    """xp: [N, Dp] f32 padded features, wq_flat: [Dp*Dp, Kp] bf16.  Returns [Npad, Kp] f32."""
    n, dp = xp.shape
    dsq, kp = wq_flat.shape
    assert dsq == dp * dp
    tn = _row_tile(n)
    npad = _ceil_to(n, tn)
    if npad != n:
        xp = jnp.pad(xp, ((0, npad - n), (0, 0)))
    return pl.pallas_call(
        _tensor_square_kernel,
        out_shape=jax.ShapeDtypeStruct((npad, kp), jnp.float32),
        grid=(npad // tn,),
        in_specs=[
            pl.BlockSpec((tn, dp), lambda i: (i, 0)),
            pl.BlockSpec((dsq, kp), lambda i: (0, 0)),                # weight resident
        ],
        out_specs=pl.BlockSpec((tn, kp), lambda i: (i, 0)),
        scratch_shapes=[pltpu.VMEM((tn, dsq), jnp.float32)],
        compiler_params=pltpu.CompilerParams(
            dimension_semantics=("parallel",),
            vmem_limit_bytes=_VMEM_LIMIT),
    )(xp, wq_flat)


# --------------------------------------------------------------------------------------
# Pallas kernel 2: S2Activation == FromS2Grid( rescaled_swish( ToS2Grid(h) ) )
#   (swish rescale folded into yfrom host-side; G and output width padded to 128-multiples)
# --------------------------------------------------------------------------------------
def _s2act_kernel(h_ref, yto_ref, yfrom_ref, o_ref):
    g = jnp.dot(h_ref[...].astype(jnp.bfloat16), yto_ref[...],
                preferred_element_type=jnp.float32)                   # [TM, Gp]  ToS2Grid
    g = g * jax.nn.sigmoid(g)                                         # swish (f32 on VPU/EUP)
    o_ref[...] = jnp.dot(g.astype(jnp.bfloat16), yfrom_ref[...],
                         preferred_element_type=jnp.float32)          # [TM, 128] FromS2Grid


def s2_activation(h, yto_p, yfrom_p):
    """h: [M, da] f32, yto_p: [da, Gp] bf16, yfrom_p: [Gp, 128] bf16.  Returns [Mpad, 128] f32."""
    m, da = h.shape
    gp = yto_p.shape[1]
    kp = yfrom_p.shape[1]
    tm = _row_tile(m, cap=256)                                        # keep [TM, Gp] f32 intermediate small
    mpad = _ceil_to(m, tm)
    if mpad != m:
        h = jnp.pad(h, ((0, mpad - m), (0, 0)))
    return pl.pallas_call(
        _s2act_kernel,
        out_shape=jax.ShapeDtypeStruct((mpad, kp), jnp.float32),
        grid=(mpad // tm,),
        in_specs=[
            pl.BlockSpec((tm, da), lambda i: (i, 0)),
            pl.BlockSpec((da, gp), lambda i: (0, 0)),
            pl.BlockSpec((gp, kp), lambda i: (0, 0)),
        ],
        out_specs=pl.BlockSpec((tm, kp), lambda i: (i, 0)),
        compiler_params=pltpu.CompilerParams(
            dimension_semantics=("parallel",),
            vmem_limit_bytes=_VMEM_LIMIT),
    )(h, yto_p, yfrom_p)


# --------------------------------------------------------------------------------------
# Feature padding: [ones (linear=True), x, zeros] -> width Dp (multiple of 8)
# --------------------------------------------------------------------------------------
def _prep_features(x, dp, with_ones):
    n, d = x.shape
    cols = []
    if with_ones:
        cols.append(jnp.ones((n, 1), jnp.float32))
    cols.append(x.astype(jnp.float32))
    pad = dp - d - (1 if with_ones else 0)
    if pad > 0:
        cols.append(jnp.zeros((n, pad), jnp.float32))
    return jnp.concatenate(cols, axis=-1) if len(cols) > 1 else cols[0]


# --------------------------------------------------------------------------------------
# S2Network (Rs_in = [(dim_in, 0)], Rs_out = [(dim_out, 0)]: scalar irreps in/out)
# --------------------------------------------------------------------------------------
class S2NetworkPallas:
    def __init__(self, key, dim_in, mul, lmax, dim_out, layers=3):
        self.mul = mul
        self.dim_act = (lmax + 1) ** 2                # dim(act.Rs_in) == dim(act.Rs_out)
        self.dim_out = dim_out
        res = 20 * (lmax + 1)

        yto, yfrom = make_s2grid_mats(lmax, res)      # [da, G], [G, da] f32
        g = yto.shape[1]
        gp = _ceil_to(g, _LANE)
        yto_p = jnp.zeros((self.dim_act, gp), jnp.float32).at[:, :g].set(yto)
        yfrom_p = jnp.zeros((gp, _LANE), jnp.float32).at[:g, :self.dim_act].set(
            _SWISH_RESCALE * yfrom)                   # swish rescale folded in
        self.yto = yto_p.astype(jnp.bfloat16)
        self.yfrom = yfrom_p.astype(jnp.bfloat16)

        def make_tsq(k, d, k_out, with_ones):
            daug = d + (1 if with_ones else 0)        # linear=True prepends a constant 1x0e feature
            dp = _ceil_to(daug, 8)
            kp = _ceil_to(k_out, _LANE)
            w = jax.random.normal(k, (daug, daug, k_out), jnp.float32) / daug
            wq = jnp.zeros((dp, dp, kp), jnp.float32).at[:daug, :daug, :k_out].set(w)
            wq = wq.reshape(dp * dp, kp).astype(jnp.bfloat16)         # flattened, lane-padded
            return dict(dp=dp, kp=kp, k=k_out, with_ones=with_ones, wq=wq)

        self.layer_params = []
        d = dim_in
        for _ in range(layers):
            key, sub = jax.random.split(key)
            self.layer_params.append(make_tsq(sub, d, mul * self.dim_act, True))
            d = mul * self.dim_act
        key, sub = jax.random.split(key)
        self.tail = make_tsq(sub, d, dim_out, False)  # tail: linear=False (no ones column)

    # Pallas forward -------------------------------------------------------------------
    def __call__(self, x):
        lead = x.shape[:-1]
        x = x.reshape(-1, x.shape[-1]).astype(jnp.float32)
        n = x.shape[0]
        for p in self.layer_params:
            xp = _prep_features(x, p["dp"], p["with_ones"])
            h = tensor_square(xp, p["wq"])[:n, :p["k"]]               # [n, mul*da]
            h = h.reshape(n * self.mul, self.dim_act)                 # (..., -1, dim(act.Rs_in))
            ha = s2_activation(h, self.yto, self.yfrom)
            ha = ha[:n * self.mul, :self.dim_act]
            x = ha.reshape(n, self.mul * self.dim_act)                # (..., -1) flatten back
        xp = _prep_features(x, self.tail["dp"], self.tail["with_ones"])
        out = tensor_square(xp, self.tail["wq"])[:n, :self.dim_out]
        return out.reshape(*lead, self.dim_out)

    # pure-JAX reference (same math and same bf16 operand precision, no Pallas) ---------
    def reference(self, x):
        lead = x.shape[:-1]
        x = x.reshape(-1, x.shape[-1]).astype(jnp.float32)
        n = x.shape[0]

        def tsq(v, p):
            xp = _prep_features(v, p["dp"], p["with_ones"])
            z = (xp[:, :, None] * xp[:, None, :]).reshape(v.shape[0], p["dp"] * p["dp"])
            out = jnp.dot(z.astype(jnp.bfloat16), p["wq"],
                          preferred_element_type=jnp.float32)
            return out[:, :p["k"]]

        def act(h):
            g = jnp.dot(h.astype(jnp.bfloat16), self.yto,
                        preferred_element_type=jnp.float32)
            g = g * jax.nn.sigmoid(g)
            o = jnp.dot(g.astype(jnp.bfloat16), self.yfrom,
                        preferred_element_type=jnp.float32)
            return o[:, :self.dim_act]

        for p in self.layer_params:
            h = tsq(x, p).reshape(n * self.mul, self.dim_act)
            x = act(h).reshape(n, self.mul * self.dim_act)
        return tsq(x, self.tail).reshape(*lead, self.dim_out)


if __name__ == "__main__":
    key = jax.random.PRNGKey(0)
    key, kx, kp = jax.random.split(key, 3)

    batch, points, dim_in = 2, 16, 4
    mul, lmax, dim_out = 4, 2, 4

    net = S2NetworkPallas(kp, dim_in, mul, lmax, dim_out, layers=3)
    x = jax.random.normal(kx, (batch, points, dim_in), jnp.float32)

    y = net(x)
    jax.block_until_ready(y)

    assert y.shape == (batch, points, dim_out), y.shape
    assert bool(jnp.all(jnp.isfinite(y)))

    y_ref = net.reference(x)
    err = float(jnp.max(jnp.abs(y - y_ref)))
    scale = max(1.0, float(jnp.max(jnp.abs(y_ref))))
    assert err <= 2e-2 * scale, f"Pallas/reference mismatch: max abs err {err} (scale {scale})"

    print("KERNEL_OK")
</pallas_src>

<mosaic_0001>
module attributes {stable_mosaic.version = 11 : i64} {
  func.func @_tensor_square_kernel(%arg0: i32, %arg1: memref<128x8xf32, #tpu.memory_space<vmem>>, %arg2: memref<64x128xbf16, #tpu.memory_space<vmem>>, %arg3: memref<128x128xf32, #tpu.memory_space<vmem>>, %arg4: memref<128x64xf32, #tpu.memory_space<vmem>>) attributes {dimension_semantics = [#tpu.dimension_semantics<parallel>], iteration_bounds = array<i64: 1>, scalar_prefetch = 0 : i64, scratch_operands = 1 : i64, tpu.core_type = #tpu.core_type<tc>, window_params = [{transform_indices = @transform_0, window_bounds = array<i64: 128, 8>}, {pipeline_mode = #tpu.pipeline_mode<synchronous>, transform_indices = @transform_1, window_bounds = array<i64: 64, 128>}, {transform_indices = @transform_2, window_bounds = array<i64: 128, 128>}]} {
    %c0 = arith.constant 0 : index
    %c0_0 = arith.constant 0 : index
    %0 = vector.load %arg1[%c0, %c0_0] : memref<128x8xf32, #tpu.memory_space<vmem>>, vector<128x8xf32>
    %1 = vector.extract_strided_slice %0 {offsets = [0, 0], sizes = [128, 1], strides = [1, 1]} : vector<128x8xf32> to vector<128x1xf32>
    %2 = vector.broadcast %1 : vector<128x1xf32> to vector<128x8xf32>
    %3 = arith.mulf %2, %0 : vector<128x8xf32>
    %c0_1 = arith.constant 0 : index
    %c0_2 = arith.constant 0 : index
    %4 = vector.load %arg4[%c0_1, %c0_2] : memref<128x64xf32, #tpu.memory_space<vmem>>, vector<128x8xf32>
    tpu.vector_store %arg4[%c0_1, %c0_2], %3 {strides = array<i32>} : memref<128x64xf32, #tpu.memory_space<vmem>>, vector<128x8xf32>,
    %5 = vector.extract_strided_slice %0 {offsets = [0, 1], sizes = [128, 1], strides = [1, 1]} : vector<128x8xf32> to vector<128x1xf32>
    %6 = vector.broadcast %5 : vector<128x1xf32> to vector<128x8xf32>
    %7 = arith.mulf %6, %0 : vector<128x8xf32>
    %c0_3 = arith.constant 0 : index
    %c8 = arith.constant 8 : index
    %8 = vector.load %arg4[%c0_3, %c8] : memref<128x64xf32, #tpu.memory_space<vmem>>, vector<128x8xf32>
    tpu.vector_store %arg4[%c0_3, %c8], %7 {strides = array<i32>} : memref<128x64xf32, #tpu.memory_space<vmem>>, vector<128x8xf32>,
    %9 = vector.extract_strided_slice %0 {offsets = [0, 2], sizes = [128, 1], strides = [1, 1]} : vector<128x8xf32> to vector<128x1xf32>
    %10 = vector.broadcast %9 : vector<128x1xf32> to vector<128x8xf32>
    %11 = arith.mulf %10, %0 : vector<128x8xf32>
    %c0_4 = arith.constant 0 : index
    %c16 = arith.constant 16 : index
    %12 = vector.load %arg4[%c0_4, %c16] : memref<128x64xf32, #tpu.memory_space<vmem>>, vector<128x8xf32>
    tpu.vector_store %arg4[%c0_4, %c16], %11 {strides = array<i32>} : memref<128x64xf32, #tpu.memory_space<vmem>>, vector<128x8xf32>,
    %13 = vector.extract_strided_slice %0 {offsets = [0, 3], sizes = [128, 1], strides = [1, 1]} : vector<128x8xf32> to vector<128x1xf32>
    %14 = vector.broadcast %13 : vector<128x1xf32> to vector<128x8xf32>
    %15 = arith.mulf %14, %0 : vector<128x8xf32>
    %c0_5 = arith.constant 0 : index
    %c24 = arith.constant 24 : index
    %16 = vector.load %arg4[%c0_5, %c24] : memref<128x64xf32, #tpu.memory_space<vmem>>, vector<128x8xf32>
    tpu.vector_store %arg4[%c0_5, %c24], %15 {strides = array<i32>} : memref<128x64xf32, #tpu.memory_space<vmem>>, vector<128x8xf32>,
    %17 = vector.extract_strided_slice %0 {offsets = [0, 4], sizes = [128, 1], strides = [1, 1]} : vector<128x8xf32> to vector<128x1xf32>
    %18 = vector.broadcast %17 : vector<128x1xf32> to vector<128x8xf32>
    %19 = arith.mulf %18, %0 : vector<128x8xf32>
    %c0_6 = arith.constant 0 : index
    %c32 = arith.constant 32 : index
    %20 = vector.load %arg4[%c0_6, %c32] : memref<128x64xf32, #tpu.memory_space<vmem>>, vector<128x8xf32>
    tpu.vector_store %arg4[%c0_6, %c32], %19 {strides = array<i32>} : memref<128x64xf32, #tpu.memory_space<vmem>>, vector<128x8xf32>,
    %21 = vector.extract_strided_slice %0 {offsets = [0, 5], sizes = [128, 1], strides = [1, 1]} : vector<128x8xf32> to vector<128x1xf32>
    %22 = vector.broadcast %21 : vector<128x1xf32> to vector<128x8xf32>
    %23 = arith.mulf %22, %0 : vector<128x8xf32>
    %c0_7 = arith.constant 0 : index
    %c40 = arith.constant 40 : index
    %24 = vector.load %arg4[%c0_7, %c40] : memref<128x64xf32, #tpu.memory_space<vmem>>, vector<128x8xf32>
    tpu.vector_store %arg4[%c0_7, %c40], %23 {strides = array<i32>} : memref<128x64xf32, #tpu.memory_space<vmem>>, vector<128x8xf32>,
    %25 = vector.extract_strided_slice %0 {offsets = [0, 6], sizes = [128, 1], strides = [1, 1]} : vector<128x8xf32> to vector<128x1xf32>
    %26 = vector.broadcast %25 : vector<128x1xf32> to vector<128x8xf32>
    %27 = arith.mulf %26, %0 : vector<128x8xf32>
    %c0_8 = arith.constant 0 : index
    %c48 = arith.constant 48 : index
    %28 = vector.load %arg4[%c0_8, %c48] : memref<128x64xf32, #tpu.memory_space<vmem>>, vector<128x8xf32>
    tpu.vector_store %arg4[%c0_8, %c48], %27 {strides = array<i32>} : memref<128x64xf32, #tpu.memory_space<vmem>>, vector<128x8xf32>,
    %29 = vector.extract_strided_slice %0 {offsets = [0, 7], sizes = [128, 1], strides = [1, 1]} : vector<128x8xf32> to vector<128x1xf32>
    %30 = vector.broadcast %29 : vector<128x1xf32> to vector<128x8xf32>
    %31 = arith.mulf %30, %0 : vector<128x8xf32>
    %c0_9 = arith.constant 0 : index
    %c56 = arith.constant 56 : index
    %32 = vector.load %arg4[%c0_9, %c56] : memref<128x64xf32, #tpu.memory_space<vmem>>, vector<128x8xf32>
    tpu.vector_store %arg4[%c0_9, %c56], %31 {strides = array<i32>} : memref<128x64xf32, #tpu.memory_space<vmem>>, vector<128x8xf32>,
    %c0_10 = arith.constant 0 : index
    %c0_11 = arith.constant 0 : index
    %33 = vector.load %arg4[%c0_10, %c0_11] : memref<128x64xf32, #tpu.memory_space<vmem>>, vector<128x64xf32>
    %34 = arith.truncf %33 : vector<128x64xf32> to vector<128x64xbf16>
    %c0_12 = arith.constant 0 : index
    %c0_13 = arith.constant 0 : index
    %35 = vector.load %arg2[%c0_12, %c0_13] : memref<64x128xbf16, #tpu.memory_space<vmem>>, vector<64x128xbf16>
    %cst = arith.constant dense<0.000000e+00> : vector<128x128xf32>
    %36 = tpu.matmul %34, %35, %cst {dimension_numbers = #tpu.dot_dimension_numbers<[1], [0], [0], [1], [0, 0, 1, 1], [], []>} : vector<128x64xbf16>, vector<64x128xbf16>, vector<128x128xf32> -> vector<128x128xf32>
    %c0_14 = arith.constant 0 : index
    %c0_15 = arith.constant 0 : index
    %37 = vector.load %arg3[%c0_14, %c0_15] : memref<128x128xf32, #tpu.memory_space<vmem>>, vector<128x128xf32>
    tpu.vector_store %arg3[%c0_14, %c0_15], %36 {strides = array<i32>} : memref<128x128xf32, #tpu.memory_space<vmem>>, vector<128x128xf32>,
    return
  }
  func.func @transform_0(%arg0: i32) -> (i32, i32) {
    %c0_i32 = arith.constant 0 : i32
    %c0_i32_0 = arith.constant 0 : i32
    return %arg0, %c0_i32 : i32, i32
  }
  func.func @transform_1(%arg0: i32) -> (i32, i32) {
    %c0_i32 = arith.constant 0 : i32
    %c0_i32_0 = arith.constant 0 : i32
    %c0_i32_1 = arith.constant 0 : i32
    return %c0_i32, %c0_i32_0 : i32, i32
  }
  func.func @transform_2(%arg0: i32) -> (i32, i32) {
    %c0_i32 = arith.constant 0 : i32
    %c0_i32_0 = arith.constant 0 : i32
    return %arg0, %c0_i32 : i32, i32
  }
}

</mosaic_0001>

<llo_original>
// kernel: tpu_custom_call.1
$region0: #{tpu_custom_call.1}
  #allocation0 [shape = 'u32[]', space=smem, size = 0x4, offset = 0x4, fixed_abs, tag = 'smem constant byte address 0x4 - core index']
  #allocation1 [shape = 'u32[144,128]{1,0:T(1,128)}', space=vmem, size = 0x12000, scoped, tag = 'internal scratch']
  #allocation2 [shape = 'f32[128,64]{1,0:T(8,128)}', space=vmem, size = 0x10000, scoped, tag = 'scratch operand']
  %s0 = inlined_call_operand.vmem [shape: f32[128,8], index: 0, kind: input, shape index: {}]
  %s1 = inlined_call_operand.vmem [shape: bf16[64,128], index: 1, kind: input, shape index: {}]
  %s2 = inlined_call_operand.hbm [shape: f32[128,128], index: 2, kind: output, shape index: {}]
  %s3 = sld [smem:[#allocation0]]
  $region18: #{tpu_custom_call.1} parent=0
    _
  %s5 = ssub.s32 1, %s3
  %s6 = scalar_select 0, %s5, %s3
  $region1: #{tpu_custom_call.1} parent=0
    #allocation3 [shape = 'u8[65536]{0}', space=vmem, size = 0x10000, scoped, tag = 'output window, operand 0, single buffered']
    #allocation4 [shape = 's32[1]{0}', space=sflag, size = 0x4, scoped, tag = 'scoped memory for tpu_custom_call.1']
    %7 = vsyncpa [#allocation4], 0
    // Predicated region
    $region2: #{tpu_custom_call.1} parent=1 // pred_check
      _
    $region3: #{tpu_custom_call.1} parent=1 // pred_check_branch
      %9 = sbr.rel (0) target = $region5
    $region4: #{tpu_custom_call.1} parent=1 // pred_region
      _
    $region5: #{tpu_custom_call.1} parent=1 // pred_fallthru
      _
    // Predicated region
    $region6: #{tpu_custom_call.1} parent=1 // pred_check
      _
    $region7: #{tpu_custom_call.1} parent=1 // pred_check_branch
      %11 = sbr.rel (0) target = $region9
    $region8: #{tpu_custom_call.1} parent=1 // pred_region
      _
    $region9: #{tpu_custom_call.1} parent=1 // pred_fallthru
      _
    %v13 = vld [vmem:[%s0] sm:$0xff]
    %v14 = vld [vmem:[%s0 + $0x8] sm:$0xff]
    %v15 = vld [vmem:[%s0 + $0x10] sm:$0xff]
    %v16 = vld [vmem:[%s0 + $0x18] sm:$0xff]
    %v17 = vld [vmem:[%s0 + $0x20] sm:$0xff]
    %v18 = vld [vmem:[%s0 + $0x28] sm:$0xff]
    %v19 = vld [vmem:[%s0 + $0x30] sm:$0xff]
    %v20 = vld [vmem:[%s0 + $0x38] sm:$0xff]
    %v21 = vld [vmem:[%s0 + $0x40] sm:$0xff]
    %v22 = vld [vmem:[%s0 + $0x48] sm:$0xff]
    %v23 = vld [vmem:[%s0 + $0x50] sm:$0xff]
    %v24 = vld [vmem:[%s0 + $0x58] sm:$0xff]
    %v25 = vld [vmem:[%s0 + $0x60] sm:$0xff]
    %v26 = vld [vmem:[%s0 + $0x68] sm:$0xff]
    %v27 = vld [vmem:[%s0 + $0x70] sm:$0xff]
    %v28 = vld [vmem:[%s0 + $0x78] sm:$0xff]
    %30 = vset.pattern.permute.xlu0 0
    %31 = vperm.xlu0 %30, %v13
    %v32 = vpop.permute.xlu0 %31
    %35 = vset.pattern.permute.xlu0 0
    %36 = vperm.xlu0 %35, %v14
    %v37 = vpop.permute.xlu0 %36
    %40 = vset.pattern.permute.xlu0 0
    %41 = vperm.xlu0 %40, %v15
    %v42 = vpop.permute.xlu0 %41
    %45 = vset.pattern.permute.xlu0 0
    %46 = vperm.xlu0 %45, %v16
    %v47 = vpop.permute.xlu0 %46
    %50 = vset.pattern.permute.xlu0 0
    %51 = vperm.xlu0 %50, %v17
    %v52 = vpop.permute.xlu0 %51
    %55 = vset.pattern.permute.xlu0 0
    %56 = vperm.xlu0 %55, %v18
    %v57 = vpop.permute.xlu0 %56
    %60 = vset.pattern.permute.xlu0 0
    %61 = vperm.xlu0 %60, %v19
    %v62 = vpop.permute.xlu0 %61
    %65 = vset.pattern.permute.xlu0 0
    %66 = vperm.xlu0 %65, %v20
    %v67 = vpop.permute.xlu0 %66
    %70 = vset.pattern.permute.xlu0 0
    %71 = vperm.xlu0 %70, %v21
    %v72 = vpop.permute.xlu0 %71
    %75 = vset.pattern.permute.xlu0 0
    %76 = vperm.xlu0 %75, %v22
    %v77 = vpop.permute.xlu0 %76
    %80 = vset.pattern.permute.xlu0 0
    %81 = vperm.xlu0 %80, %v23
    %v82 = vpop.permute.xlu0 %81
    %85 = vset.pattern.permute.xlu0 0
    %86 = vperm.xlu0 %85, %v24
    %v87 = vpop.permute.xlu0 %86
    %90 = vset.pattern.permute.xlu0 0
    %91 = vperm.xlu0 %90, %v25
    %v92 = vpop.permute.xlu0 %91
    %95 = vset.pattern.permute.xlu0 0
    %96 = vperm.xlu0 %95, %v26
    %v97 = vpop.permute.xlu0 %96
    %100 = vset.pattern.permute.xlu0 0
    %101 = vperm.xlu0 %100, %v27
    %v102 = vpop.permute.xlu0 %101
    %105 = vset.pattern.permute.xlu0 0
    %106 = vperm.xlu0 %105, %v28
    %v107 = vpop.permute.xlu0 %106
    %v109 = vmul.f32 %v32, %v13
    %v110 = vmul.f32 %v37, %v14
    %v111 = vmul.f32 %v42, %v15
    %v112 = vmul.f32 %v47, %v16
    %v113 = vmul.f32 %v52, %v17
    %v114 = vmul.f32 %v57, %v18
    %v115 = vmul.f32 %v62, %v19
    %v116 = vmul.f32 %v67, %v20
    %v117 = vmul.f32 %v72, %v21
    %v118 = vmul.f32 %v77, %v22
    %v119 = vmul.f32 %v82, %v23
    %v120 = vmul.f32 %v87, %v24
    %v121 = vmul.f32 %v92, %v25
    %v122 = vmul.f32 %v97, %v26
    %v123 = vmul.f32 %v102, %v27
    %v124 = vmul.f32 %v107, %v28
    %vm125 = vcmask 64512
    %126 = vst.msk [vmem:[#allocation2] sm:$0xff] %vm125, %v109
    %127 = vst.msk [vmem:[#allocation2 + $0x8] sm:$0xff] %vm125, %v110
    %128 = vst.msk [vmem:[#allocation2 + $0x10] sm:$0xff] %vm125, %v111
    %129 = vst.msk [vmem:[#allocation2 + $0x18] sm:$0xff] %vm125, %v112
    %130 = vst.msk [vmem:[#allocation2 + $0x20] sm:$0xff] %vm125, %v113
    %131 = vst.msk [vmem:[#allocation2 + $0x28] sm:$0xff] %vm125, %v114
    %132 = vst.msk [vmem:[#allocation2 + $0x30] sm:$0xff] %vm125, %v115
    %133 = vst.msk [vmem:[#allocation2 + $0x38] sm:$0xff] %vm125, %v116
    %134 = vst.msk [vmem:[#allocation2 + $0x40] sm:$0xff] %vm125, %v117
    %135 = vst.msk [vmem:[#allocation2 + $0x48] sm:$0xff] %vm125, %v118
    %136 = vst.msk [vmem:[#allocation2 + $0x50] sm:$0xff] %vm125, %v119
    %137 = vst.msk [vmem:[#allocation2 + $0x58] sm:$0xff] %vm125, %v120
    %138 = vst.msk [vmem:[#allocation2 + $0x60] sm:$0xff] %vm125, %v121
    %139 = vst.msk [vmem:[#allocation2 + $0x68] sm:$0xff] %vm125, %v122
    %140 = vst.msk [vmem:[#allocation2 + $0x70] sm:$0xff] %vm125, %v123
    %141 = vst.msk [vmem:[#allocation2 + $0x78] sm:$0xff] %vm125, %v124
    %142 = vset.pattern.permute.xlu0 1
    %143 = vperm.xlu0 %142, %v13
    %v144 = vpop.permute.xlu0 %143
    %146 = vset.pattern.permute.xlu0 1
    %147 = vperm.xlu0 %146, %v14
    %v148 = vpop.permute.xlu0 %147
    %150 = vset.pattern.permute.xlu0 1
    %151 = vperm.xlu0 %150, %v15
    %v152 = vpop.permute.xlu0 %151
    %154 = vset.pattern.permute.xlu0 1
    %155 = vperm.xlu0 %154, %v16
    %v156 = vpop.permute.xlu0 %155
    %158 = vset.pattern.permute.xlu0 1
    %159 = vperm.xlu0 %158, %v17
    %v160 = vpop.permute.xlu0 %159
    %162 = vset.pattern.permute.xlu0 1
    %163 = vperm.xlu0 %162, %v18
    %v164 = vpop.permute.xlu0 %163
    %166 = vset.pattern.permute.xlu0 1
    %167 = vperm.xlu0 %166, %v19
    %v168 = vpop.permute.xlu0 %167
    %170 = vset.pattern.permute.xlu0 1
    %171 = vperm.xlu0 %170, %v20
    %v172 = vpop.permute.xlu0 %171
    %174 = vset.pattern.permute.xlu0 1
    %175 = vperm.xlu0 %174, %v21
    %v176 = vpop.permute.xlu0 %175
    %178 = vset.pattern.permute.xlu0 1
    %179 = vperm.xlu0 %178, %v22
    %v180 = vpop.permute.xlu0 %179
    %182 = vset.pattern.permute.xlu0 1
    %183 = vperm.xlu0 %182, %v23
    %v184 = vpop.permute.xlu0 %183
    %186 = vset.pattern.permute.xlu0 1
    %187 = vperm.xlu0 %186, %v24
    %v188 = vpop.permute.xlu0 %187
    %190 = vset.pattern.permute.xlu0 1
    %191 = vperm.xlu0 %190, %v25
    %v192 = vpop.permute.xlu0 %191
    %194 = vset.pattern.permute.xlu0 1
    %195 = vperm.xlu0 %194, %v26
    %v196 = vpop.permute.xlu0 %195
    %198 = vset.pattern.permute.xlu0 1
    %199 = vperm.xlu0 %198, %v27
    %v200 = vpop.permute.xlu0 %199
    %202 = vset.pattern.permute.xlu0 1
    %203 = vperm.xlu0 %202, %v28
    %v204 = vpop.permute.xlu0 %203
    %v206 = vmul.f32 %v144, %v13
    %v207 = vmul.f32 %v148, %v14
    %v208 = vmul.f32 %v152, %v15
    %v209 = vmul.f32 %v156, %v16
    %v210 = vmul.f32 %v160, %v17
    %v211 = vmul.f32 %v164, %v18
    %v212 = vmul.f32 %v168, %v19
    %v213 = vmul.f32 %v172, %v20
    %v214 = vmul.f32 %v176, %v21
    %v215 = vmul.f32 %v180, %v22
    %v216 = vmul.f32 %v184, %v23
    %v217 = vmul.f32 %v188, %v24
    %v218 = vmul.f32 %v192, %v25
    %v219 = vmul.f32 %v196, %v26
    %v220 = vmul.f32 %v200, %v27
    %v221 = vmul.f32 %v204, %v28
    %238 = vrot.lane.b32.xlu0 %v206, 8
    %v239 = vpop.permute.xlu0 %238
    %240 = vrot.lane.b32.xlu0 %v207, 8
    %v241 = vpop.permute.xlu0 %240
    %242 = vrot.lane.b32.xlu0 %v208, 8
    %v243 = vpop.permute.xlu0 %242
    %244 = vrot.lane.b32.xlu0 %v209, 8
    %v245 = vpop.permute.xlu0 %244
    %246 = vrot.lane.b32.xlu0 %v210, 8
    %v247 = vpop.permute.xlu0 %246
    %248 = vrot.lane.b32.xlu0 %v211, 8
    %v249 = vpop.permute.xlu0 %248
    %250 = vrot.lane.b32.xlu0 %v212, 8
    %v251 = vpop.permute.xlu0 %250
    %252 = vrot.lane.b32.xlu0 %v213, 8
    %v253 = vpop.permute.xlu0 %252
    %254 = vrot.lane.b32.xlu0 %v214, 8
    %v255 = vpop.permute.xlu0 %254
    %256 = vrot.lane.b32.xlu0 %v215, 8
    %v257 = vpop.permute.xlu0 %256
    %258 = vrot.lane.b32.xlu0 %v216, 8
    %v259 = vpop.permute.xlu0 %258
    %260 = vrot.lane.b32.xlu0 %v217, 8
    %v261 = vpop.permute.xlu0 %260
    %262 = vrot.lane.b32.xlu0 %v218, 8
    %v263 = vpop.permute.xlu0 %262
    %264 = vrot.lane.b32.xlu0 %v219, 8
    %v265 = vpop.permute.xlu0 %264
    %266 = vrot.lane.b32.xlu0 %v220, 8
    %v267 = vpop.permute.xlu0 %266
    %268 = vrot.lane.b32.xlu0 %v221, 8
    %v269 = vpop.permute.xlu0 %268
    %vm286 = vcmask 130112
    %287 = vst.msk [vmem:[#allocation2] sm:$0xff] %vm286, %v239
    %288 = vst.msk [vmem:[#allocation2 + $0x8] sm:$0xff] %vm286, %v241
    %289 = vst.msk [vmem:[#allocation2 + $0x10] sm:$0xff] %vm286, %v243
    %290 = vst.msk [vmem:[#allocation2 + $0x18] sm:$0xff] %vm286, %v245
    %291 = vst.msk [vmem:[#allocation2 + $0x20] sm:$0xff] %vm286, %v247
    %292 = vst.msk [vmem:[#allocation2 + $0x28] sm:$0xff] %vm286, %v249
    %293 = vst.msk [vmem:[#allocation2 + $0x30] sm:$0xff] %vm286, %v251
    %294 = vst.msk [vmem:[#allocation2 + $0x38] sm:$0xff] %vm286, %v253
    %295 = vst.msk [vmem:[#allocation2 + $0x40] sm:$0xff] %vm286, %v255
    %296 = vst.msk [vmem:[#allocation2 + $0x48] sm:$0xff] %vm286, %v257
    %297 = vst.msk [vmem:[#allocation2 + $0x50] sm:$0xff] %vm286, %v259
    %298 = vst.msk [vmem:[#allocation2 + $0x58] sm:$0xff] %vm286, %v261
    %299 = vst.msk [vmem:[#allocation2 + $0x60] sm:$0xff] %vm286, %v263
    %300 = vst.msk [vmem:[#allocation2 + $0x68] sm:$0xff] %vm286, %v265
    %301 = vst.msk [vmem:[#allocation2 + $0x70] sm:$0xff] %vm286, %v267
    %302 = vst.msk [vmem:[#allocation2 + $0x78] sm:$0xff] %vm286, %v269
    %303 = vset.pattern.permute.xlu0 2
    %304 = vperm.xlu0 %303, %v13
    %v305 = vpop.permute.xlu0 %304
    %307 = vset.pattern.permute.xlu0 2
    %308 = vperm.xlu0 %307, %v14
    %v309 = vpop.permute.xlu0 %308
    %311 = vset.pattern.permute.xlu0 2
    %312 = vperm.xlu0 %311, %v15
    %v313 = vpop.permute.xlu0 %312
    %315 = vset.pattern.permute.xlu0 2
    %316 = vperm.xlu0 %315, %v16
    %v317 = vpop.permute.xlu0 %316
    %319 = vset.pattern.permute.xlu0 2
    %320 = vperm.xlu0 %319, %v17
    %v321 = vpop.permute.xlu0 %320
    %323 = vset.pattern.permute.xlu0 2
    %324 = vperm.xlu0 %323, %v18
    %v325 = vpop.permute.xlu0 %324
    %327 = vset.pattern.permute.xlu0 2
    %328 = vperm.xlu0 %327, %v19
    %v329 = vpop.permute.xlu0 %328
    %331 = vset.pattern.permute.xlu0 2
    %332 = vperm.xlu0 %331, %v20
    %v333 = vpop.permute.xlu0 %332
    %335 = vset.pattern.permute.xlu0 2
    %336 = vperm.xlu0 %335, %v21
    %v337 = vpop.permute.xlu0 %336
    %339 = vset.pattern.permute.xlu0 2
    %340 = vperm.xlu0 %339, %v22
    %v341 = vpop.permute.xlu0 %340
    %343 = vset.pattern.permute.xlu0 2
    %344 = vperm.xlu0 %343, %v23
    %v345 = vpop.permute.xlu0 %344
    %347 = vset.pattern.permute.xlu0 2
    %348 = vperm.xlu0 %347, %v24
    %v349 = vpop.permute.xlu0 %348
    %351 = vset.pattern.permute.xlu0 2
    %352 = vperm.xlu0 %351, %v25
    %v353 = vpop.permute.xlu0 %352
    %355 = vset.pattern.permute.xlu0 2
    %356 = vperm.xlu0 %355, %v26
    %v357 = vpop.permute.xlu0 %356
    %359 = vset.pattern.permute.xlu0 2
    %360 = vperm.xlu0 %359, %v27
    %v361 = vpop.permute.xlu0 %360
    %363 = vset.pattern.permute.xlu0 2
    %364 = vperm.xlu0 %363, %v28
    %v365 = vpop.permute.xlu0 %364
    %v367 = vmul.f32 %v305, %v13
    %v368 = vmul.f32 %v309, %v14
    %v369 = vmul.f32 %v313, %v15
    %v370 = vmul.f32 %v317, %v16
    %v371 = vmul.f32 %v321, %v17
    %v372 = vmul.f32 %v325, %v18
    %v373 = vmul.f32 %v329, %v19
    %v374 = vmul.f32 %v333, %v20
    %v375 = vmul.f32 %v337, %v21
    %v376 = vmul.f32 %v341, %v22
    %v377 = vmul.f32 %v345, %v23
    %v378 = vmul.f32 %v349, %v24
    %v379 = vmul.f32 %v353, %v25
    %v380 = vmul.f32 %v357, %v26
    %v381 = vmul.f32 %v361, %v27
    %v382 = vmul.f32 %v365, %v28
    %399 = vrot.lane.b32.xlu0 %v367, 16
    %v400 = vpop.permute.xlu0 %399
    %401 = vrot.lane.b32.xlu0 %v368, 16
    %v402 = vpop.permute.xlu0 %401
    %403 = vrot.lane.b32.xlu0 %v369, 16
    %v404 = vpop.permute.xlu0 %403
    %405 = vrot.lane.b32.xlu0 %v370, 16
    %v406 = vpop.permute.xlu0 %405
    %407 = vrot.lane.b32.xlu0 %v371, 16
    %v408 = vpop.permute.xlu0 %407
    %409 = vrot.lane.b32.xlu0 %v372, 16
    %v410 = vpop.permute.xlu0 %409
    %411 = vrot.lane.b32.xlu0 %v373, 16
    %v412 = vpop.permute.xlu0 %411
    %413 = vrot.lane.b32.xlu0 %v374, 16
    %v414 = vpop.permute.xlu0 %413
    %415 = vrot.lane.b32.xlu0 %v375, 16
    %v416 = vpop.permute.xlu0 %415
    %417 = vrot.lane.b32.xlu0 %v376, 16
    %v418 = vpop.permute.xlu0 %417
    %419 = vrot.lane.b32.xlu0 %v377, 16
    %v420 = vpop.permute.xlu0 %419
    %421 = vrot.lane.b32.xlu0 %v378, 16
    %v422 = vpop.permute.xlu0 %421
    %423 = vrot.lane.b32.xlu0 %v379, 16
    %v424 = vpop.permute.xlu0 %423
    %425 = vrot.lane.b32.xlu0 %v380, 16
    %v426 = vpop.permute.xlu0 %425
    %427 = vrot.lane.b32.xlu0 %v381, 16
    %v428 = vpop.permute.xlu0 %427
    %429 = vrot.lane.b32.xlu0 %v382, 16
    %v430 = vpop.permute.xlu0 %429
    %vm447 = vcmask 195712
    %448 = vst.msk [vmem:[#allocation2] sm:$0xff] %vm447, %v400
    %449 = vst.msk [vmem:[#allocation2 + $0x8] sm:$0xff] %vm447, %v402
    %450 = vst.msk [vmem:[#allocation2 + $0x10] sm:$0xff] %vm447, %v404
    %451 = vst.msk [vmem:[#allocation2 + $0x18] sm:$0xff] %vm447, %v406
    %452 = vst.msk [vmem:[#allocation2 + $0x20] sm:$0xff] %vm447, %v408
    %453 = vst.msk [vmem:[#allocation2 + $0x28] sm:$0xff] %vm447, %v410
    %454 = vst.msk [vmem:[#allocation2 + $0x30] sm:$0xff] %vm447, %v412
    %455 = vst.msk [vmem:[#allocation2 + $0x38] sm:$0xff] %vm447, %v414
    %456 = vst.msk [vmem:[#allocation2 + $0x40] sm:$0xff] %vm447, %v416
    %457 = vst.msk [vmem:[#allocation2 + $0x48] sm:$0xff] %vm447, %v418
    %458 = vst.msk [vmem:[#allocation2 + $0x50] sm:$0xff] %vm447, %v420
    %459 = vst.msk [vmem:[#allocation2 + $0x58] sm:$0xff] %vm447, %v422
    %460 = vst.msk [vmem:[#allocation2 + $0x60] sm:$0xff] %vm447, %v424
    %461 = vst.msk [vmem:[#allocation2 + $0x68] sm:$0xff] %vm447, %v426
    %462 = vst.msk [vmem:[#allocation2 + $0x70] sm:$0xff] %vm447, %v428
    %463 = vst.msk [vmem:[#allocation2 + $0x78] sm:$0xff] %vm447, %v430
    %464 = vset.pattern.permute.xlu0 3
    %465 = vperm.xlu0 %464, %v13
    %v466 = vpop.permute.xlu0 %465
    %468 = vset.pattern.permute.xlu0 3
    %469 = vperm.xlu0 %468, %v14
    %v470 = vpop.permute.xlu0 %469
    %472 = vset.pattern.permute.xlu0 3
    %473 = vperm.xlu0 %472, %v15
    %v474 = vpop.permute.xlu0 %473
    %476 = vset.pattern.permute.xlu0 3
    %477 = vperm.xlu0 %476, %v16
    %v478 = vpop.permute.xlu0 %477
    %480 = vset.pattern.permute.xlu0 3
    %481 = vperm.xlu0 %480, %v17
    %v482 = vpop.permute.xlu0 %481
    %484 = vset.pattern.permute.xlu0 3
    %485 = vperm.xlu0 %484, %v18
    %v486 = vpop.permute.xlu0 %485
    %488 = vset.pattern.permute.xlu0 3
    %489 = vperm.xlu0 %488, %v19
    %v490 = vpop.permute.xlu0 %489
    %492 = vset.pattern.permute.xlu0 3
    %493 = vperm.xlu0 %492, %v20
    %v494 = vpop.permute.xlu0 %493
    %496 = vset.pattern.permute.xlu0 3
    %497 = vperm.xlu0 %496, %v21
    %v498 = vpop.permute.xlu0 %497
    %500 = vset.pattern.permute.xlu0 3
    %501 = vperm.xlu0 %500, %v22
    %v502 = vpop.permute.xlu0 %501
    %504 = vset.pattern.permute.xlu0 3
    %505 = vperm.xlu0 %504, %v23
    %v506 = vpop.permute.xlu0 %505
    %508 = vset.pattern.permute.xlu0 3
    %509 = vperm.xlu0 %508, %v24
    %v510 = vpop.permute.xlu0 %509
    %512 = vset.pattern.permute.xlu0 3
    %513 = vperm.xlu0 %512, %v25
    %v514 = vpop.permute.xlu0 %513
    %516 = vset.pattern.permute.xlu0 3
    %517 = vperm.xlu0 %516, %v26
    %v518 = vpop.permute.xlu0 %517
    %520 = vset.pattern.permute.xlu0 3
    %521 = vperm.xlu0 %520, %v27
    %v522 = vpop.permute.xlu0 %521
    %524 = vset.pattern.permute.xlu0 3
    %525 = vperm.xlu0 %524, %v28
    %v526 = vpop.permute.xlu0 %525
    %v528 = vmul.f32 %v466, %v13
    %v529 = vmul.f32 %v470, %v14
    %v530 = vmul.f32 %v474, %v15
    %v531 = vmul.f32 %v478, %v16
    %v532 = vmul.f32 %v482, %v17
    %v533 = vmul.f32 %v486, %v18
    %v534 = vmul.f32 %v490, %v19
    %v535 = vmul.f32 %v494, %v20
    %v536 = vmul.f32 %v498, %v21
    %v537 = vmul.f32 %v502, %v22
    %v538 = vmul.f32 %v506, %v23
    %v539 = vmul.f32 %v510, %v24
    %v540 = vmul.f32 %v514, %v25
    %v541 = vmul.f32 %v518, %v26
    %v542 = vmul.f32 %v522, %v27
    %v543 = vmul.f32 %v526, %v28
    %560 = vrot.lane.b32.xlu0 %v528, 24
    %v561 = vpop.permute.xlu0 %560
    %562 = vrot.lane.b32.xlu0 %v529, 24
    %v563 = vpop.permute.xlu0 %562
    %564 = vrot.lane.b32.xlu0 %v530, 24
    %v565 = vpop.permute.xlu0 %564
    %566 = vrot.lane.b32.xlu0 %v531, 24
    %v567 = vpop.permute.xlu0 %566
    %568 = vrot.lane.b32.xlu0 %v532, 24
    %v569 = vpop.permute.xlu0 %568
    %570 = vrot.lane.b32.xlu0 %v533, 24
    %v571 = vpop.permute.xlu0 %570
    %572 = vrot.lane.b32.xlu0 %v534, 24
    %v573 = vpop.permute.xlu0 %572
    %574 = vrot.lane.b32.xlu0 %v535, 24
    %v575 = vpop.permute.xlu0 %574
    %576 = vrot.lane.b32.xlu0 %v536, 24
    %v577 = vpop.permute.xlu0 %576
    %578 = vrot.lane.b32.xlu0 %v537, 24
    %v579 = vpop.permute.xlu0 %578
    %580 = vrot.lane.b32.xlu0 %v538, 24
    %v581 = vpop.permute.xlu0 %580
    %582 = vrot.lane.b32.xlu0 %v539, 24
    %v583 = vpop.permute.xlu0 %582
    %584 = vrot.lane.b32.xlu0 %v540, 24
    %v585 = vpop.permute.xlu0 %584
    %586 = vrot.lane.b32.xlu0 %v541, 24
    %v587 = vpop.permute.xlu0 %586
    %588 = vrot.lane.b32.xlu0 %v542, 24
    %v589 = vpop.permute.xlu0 %588
    %590 = vrot.lane.b32.xlu0 %v543, 24
    %v591 = vpop.permute.xlu0 %590
    %vm608 = vcmask 261312
    %609 = vst.msk [vmem:[#allocation2] sm:$0xff] %vm608, %v561
    %610 = vst.msk [vmem:[#allocation2 + $0x8] sm:$0xff] %vm608, %v563
    %611 = vst.msk [vmem:[#allocation2 + $0x10] sm:$0xff] %vm608, %v565
    %612 = vst.msk [vmem:[#allocation2 + $0x18] sm:$0xff] %vm608, %v567
    %613 = vst.msk [vmem:[#allocation2 + $0x20] sm:$0xff] %vm608, %v569
    %614 = vst.msk [vmem:[#allocation2 + $0x28] sm:$0xff] %vm608, %v571
    %615 = vst.msk [vmem:[#allocation2 + $0x30] sm:$0xff] %vm608, %v573
    %616 = vst.msk [vmem:[#allocation2 + $0x38] sm:$0xff] %vm608, %v575
    %617 = vst.msk [vmem:[#allocation2 + $0x40] sm:$0xff] %vm608, %v577
    %618 = vst.msk [vmem:[#allocation2 + $0x48] sm:$0xff] %vm608, %v579
    %619 = vst.msk [vmem:[#allocation2 + $0x50] sm:$0xff] %vm608, %v581
    %620 = vst.msk [vmem:[#allocation2 + $0x58] sm:$0xff] %vm608, %v583
    %621 = vst.msk [vmem:[#allocation2 + $0x60] sm:$0xff] %vm608, %v585
    %622 = vst.msk [vmem:[#allocation2 + $0x68] sm:$0xff] %vm608, %v587
    %623 = vst.msk [vmem:[#allocation2 + $0x70] sm:$0xff] %vm608, %v589
    %624 = vst.msk [vmem:[#allocation2 + $0x78] sm:$0xff] %vm608, %v591
    %625 = vset.pattern.permute.xlu0 4
    %626 = vperm.xlu0 %625, %v13
    %v627 = vpop.permute.xlu0 %626
    %629 = vset.pattern.permute.xlu0 4
    %630 = vperm.xlu0 %629, %v14
    %v631 = vpop.permute.xlu0 %630
    %633 = vset.pattern.permute.xlu0 4
    %634 = vperm.xlu0 %633, %v15
    %v635 = vpop.permute.xlu0 %634
    %637 = vset.pattern.permute.xlu0 4
    %638 = vperm.xlu0 %637, %v16
    %v639 = vpop.permute.xlu0 %638
    %641 = vset.pattern.permute.xlu0 4
    %642 = vperm.xlu0 %641, %v17
    %v643 = vpop.permute.xlu0 %642
    %645 = vset.pattern.permute.xlu0 4
    %646 = vperm.xlu0 %645, %v18
    %v647 = vpop.permute.xlu0 %646
    %649 = vset.pattern.permute.xlu0 4
    %650 = vperm.xlu0 %649, %v19
    %v651 = vpop.permute.xlu0 %650
    %653 = vset.pattern.permute.xlu0 4
    %654 = vperm.xlu0 %653, %v20
    %v655 = vpop.permute.xlu0 %654
    %657 = vset.pattern.permute.xlu0 4
    %658 = vperm.xlu0 %657, %v21
    %v659 = vpop.permute.xlu0 %658
    %661 = vset.pattern.permute.xlu0 4
    %662 = vperm.xlu0 %661, %v22
    %v663 = vpop.permute.xlu0 %662
    %665 = vset.pattern.permute.xlu0 4
    %666 = vperm.xlu0 %665, %v23
    %v667 = vpop.permute.xlu0 %666
    %669 = vset.pattern.permute.xlu0 4
    %670 = vperm.xlu0 %669, %v24
    %v671 = vpop.permute.xlu0 %670
    %673 = vset.pattern.permute.xlu0 4
    %674 = vperm.xlu0 %673, %v25
    %v675 = vpop.permute.xlu0 %674
    %677 = vset.pattern.permute.xlu0 4
    %678 = vperm.xlu0 %677, %v26
    %v679 = vpop.permute.xlu0 %678
    %681 = vset.pattern.permute.xlu0 4
    %682 = vperm.xlu0 %681, %v27
    %v683 = vpop.permute.xlu0 %682
    %685 = vset.pattern.permute.xlu0 4
    %686 = vperm.xlu0 %685, %v28
    %v687 = vpop.permute.xlu0 %686
    %v689 = vmul.f32 %v627, %v13
    %v690 = vmul.f32 %v631, %v14
    %v691 = vmul.f32 %v635, %v15
    %v692 = vmul.f32 %v639, %v16
    %v693 = vmul.f32 %v643, %v17
    %v694 = vmul.f32 %v647, %v18
    %v695 = vmul.f32 %v651, %v19
    %v696 = vmul.f32 %v655, %v20
    %v697 = vmul.f32 %v659, %v21
    %v698 = vmul.f32 %v663, %v22
    %v699 = vmul.f32 %v667, %v23
    %v700 = vmul.f32 %v671, %v24
    %v701 = vmul.f32 %v675, %v25
    %v702 = vmul.f32 %v679, %v26
    %v703 = vmul.f32 %v683, %v27
    %v704 = vmul.f32 %v687, %v28
    %721 = vrot.lane.b32.xlu0 %v689, 32
    %v722 = vpop.permute.xlu0 %721
    %723 = vrot.lane.b32.xlu0 %v690, 32
    %v724 = vpop.permute.xlu0 %723
    %725 = vrot.lane.b32.xlu0 %v691, 32
    %v726 = vpop.permute.xlu0 %725
    %727 = vrot.lane.b32.xlu0 %v692, 32
    %v728 = vpop.permute.xlu0 %727
    %729 = vrot.lane.b32.xlu0 %v693, 32
    %v730 = vpop.permute.xlu0 %729
    %731 = vrot.lane.b32.xlu0 %v694, 32
    %v732 = vpop.permute.xlu0 %731
    %733 = vrot.lane.b32.xlu0 %v695, 32
    %v734 = vpop.permute.xlu0 %733
    %735 = vrot.lane.b32.xlu0 %v696, 32
    %v736 = vpop.permute.xlu0 %735
    %737 = vrot.lane.b32.xlu0 %v697, 32
    %v738 = vpop.permute.xlu0 %737
    %739 = vrot.lane.b32.xlu0 %v698, 32
    %v740 = vpop.permute.xlu0 %739
    %741 = vrot.lane.b32.xlu0 %v699, 32
    %v742 = vpop.permute.xlu0 %741
    %743 = vrot.lane.b32.xlu0 %v700, 32
    %v744 = vpop.permute.xlu0 %743
    %745 = vrot.lane.b32.xlu0 %v701, 32
    %v746 = vpop.permute.xlu0 %745
    %747 = vrot.lane.b32.xlu0 %v702, 32
    %v748 = vpop.permute.xlu0 %747
    %749 = vrot.lane.b32.xlu0 %v703, 32
    %v750 = vpop.permute.xlu0 %749
    %751 = vrot.lane.b32.xlu0 %v704, 32
    %v752 = vpop.permute.xlu0 %751
    %vm769 = vcmask 326912
    %770 = vst.msk [vmem:[#allocation2] sm:$0xff] %vm769, %v722
    %771 = vst.msk [vmem:[#allocation2 + $0x8] sm:$0xff] %vm769, %v724
    %772 = vst.msk [vmem:[#allocation2 + $0x10] sm:$0xff] %vm769, %v726
    %773 = vst.msk [vmem:[#allocation2 + $0x18] sm:$0xff] %vm769, %v728
    %774 = vst.msk [vmem:[#allocation2 + $0x20] sm:$0xff] %vm769, %v730
    %775 = vst.msk [vmem:[#allocation2 + $0x28] sm:$0xff] %vm769, %v732
    %776 = vst.msk [vmem:[#allocation2 + $0x30] sm:$0xff] %vm769, %v734
    %777 = vst.msk [vmem:[#allocation2 + $0x38] sm:$0xff] %vm769, %v736
    %778 = vst.msk [vmem:[#allocation2 + $0x40] sm:$0xff] %vm769, %v738
    %779 = vst.msk [vmem:[#allocation2 + $0x48] sm:$0xff] %vm769, %v740
    %780 = vst.msk [vmem:[#allocation2 + $0x50] sm:$0xff] %vm769, %v742
    %781 = vst.msk [vmem:[#allocation2 + $0x58] sm:$0xff] %vm769, %v744
    %782 = vst.msk [vmem:[#allocation2 + $0x60] sm:$0xff] %vm769, %v746
    %783 = vst.msk [vmem:[#allocation2 + $0x68] sm:$0xff] %vm769, %v748
    %784 = vst.msk [vmem:[#allocation2 + $0x70] sm:$0xff] %vm769, %v750
    %785 = vst.msk [vmem:[#allocation2 + $0x78] sm:$0xff] %vm769, %v752
    %786 = vset.pattern.permute.xlu0 5
    %787 = vperm.xlu0 %786, %v13
    %v788 = vpop.permute.xlu0 %787
    %790 = vset.pattern.permute.xlu0 5
    %791 = vperm.xlu0 %790, %v14
    %v792 = vpop.permute.xlu0 %791
    %794 = vset.pattern.permute.xlu0 5
    %795 = vperm.xlu0 %794, %v15
    %v796 = vpop.permute.xlu0 %795
    %798 = vset.pattern.permute.xlu0 5
    %799 = vperm.xlu0 %798, %v16
    %v800 = vpop.permute.xlu0 %799
    %802 = vset.pattern.permute.xlu0 5
    %803 = vperm.xlu0 %802, %v17
    %v804 = vpop.permute.xlu0 %803
    %806 = vset.pattern.permute.xlu0 5
    %807 = vperm.xlu0 %806, %v18
    %v808 = vpop.permute.xlu0 %807
    %810 = vset.pattern.permute.xlu0 5
    %811 = vperm.xlu0 %810, %v19
    %v812 = vpop.permute.xlu0 %811
    %814 = vset.pattern.permute.xlu0 5
    %815 = vperm.xlu0 %814, %v20
    %v816 = vpop.permute.xlu0 %815
    %818 = vset.pattern.permute.xlu0 5
    %819 = vperm.xlu0 %818, %v21
    %v820 = vpop.permute.xlu0 %819
    %822 = vset.pattern.permute.xlu0 5
    %823 = vperm.xlu0 %822, %v22
    %v824 = vpop.permute.xlu0 %823
    %826 = vset.pattern.permute.xlu0 5
    %827 = vperm.xlu0 %826, %v23
    %v828 = vpop.permute.xlu0 %827
    %830 = vset.pattern.permute.xlu0 5
    %831 = vperm.xlu0 %830, %v24
    %v832 = vpop.permute.xlu0 %831
    %834 = vset.pattern.permute.xlu0 5
    %835 = vperm.xlu0 %834, %v25
    %v836 = vpop.permute.xlu0 %835
    %838 = vset.pattern.permute.xlu0 5
    %839 = vperm.xlu0 %838, %v26
    %v840 = vpop.permute.xlu0 %839
    %842 = vset.pattern.permute.xlu0 5
    %843 = vperm.xlu0 %842, %v27
    %v844 = vpop.permute.xlu0 %843
    %846 = vset.pattern.permute.xlu0 5
    %847 = vperm.xlu0 %846, %v28
    %v848 = vpop.permute.xlu0 %847
    %v850 = vmul.f32 %v788, %v13
    %v851 = vmul.f32 %v792, %v14
    %v852 = vmul.f32 %v796, %v15
    %v853 = vmul.f32 %v800, %v16
    %v854 = vmul.f32 %v804, %v17
    %v855 = vmul.f32 %v808, %v18
    %v856 = vmul.f32 %v812, %v19
    %v857 = vmul.f32 %v816, %v20
    %v858 = vmul.f32 %v820, %v21
    %v859 = vmul.f32 %v824, %v22
    %v860 = vmul.f32 %v828, %v23
    %v861 = vmul.f32 %v832, %v24
    %v862 = vmul.f32 %v836, %v25
    %v863 = vmul.f32 %v840, %v26
    %v864 = vmul.f32 %v844, %v27
    %v865 = vmul.f32 %v848, %v28
    %882 = vrot.lane.b32.xlu0 %v850, 40
    %v883 = vpop.permute.xlu0 %882
    %884 = vrot.lane.b32.xlu0 %v851, 40
    %v885 = vpop.permute.xlu0 %884
    %886 = vrot.lane.b32.xlu0 %v852, 40
    %v887 = vpop.permute.xlu0 %886
    %888 = vrot.lane.b32.xlu0 %v853, 40
    %v889 = vpop.permute.xlu0 %888
    %890 = vrot.lane.b32.xlu0 %v854, 40
    %v891 = vpop.permute.xlu0 %890
    %892 = vrot.lane.b32.xlu0 %v855, 40
    %v893 = vpop.permute.xlu0 %892
    %894 = vrot.lane.b32.xlu0 %v856, 40
    %v895 = vpop.permute.xlu0 %894
    %896 = vrot.lane.b32.xlu0 %v857, 40
    %v897 = vpop.permute.xlu0 %896
    %898 = vrot.lane.b32.xlu0 %v858, 40
    %v899 = vpop.permute.xlu0 %898
    %900 = vrot.lane.b32.xlu0 %v859, 40
    %v901 = vpop.permute.xlu0 %900
    %902 = vrot.lane.b32.xlu0 %v860, 40
    %v903 = vpop.permute.xlu0 %902
    %904 = vrot.lane.b32.xlu0 %v861, 40
    %v905 = vpop.permute.xlu0 %904
    %906 = vrot.lane.b32.xlu0 %v862, 40
    %v907 = vpop.permute.xlu0 %906
    %908 = vrot.lane.b32.xlu0 %v863, 40
    %v909 = vpop.permute.xlu0 %908
    %910 = vrot.lane.b32.xlu0 %v864, 40
    %v911 = vpop.permute.xlu0 %910
    %912 = vrot.lane.b32.xlu0 %v865, 40
    %v913 = vpop.permute.xlu0 %912
    %vm930 = vcmask 392512
    %931 = vst.msk [vmem:[#allocation2] sm:$0xff] %vm930, %v883
    %932 = vst.msk [vmem:[#allocation2 + $0x8] sm:$0xff] %vm930, %v885
    %933 = vst.msk [vmem:[#allocation2 + $0x10] sm:$0xff] %vm930, %v887
    %934 = vst.msk [vmem:[#allocation2 + $0x18] sm:$0xff] %vm930, %v889
    %935 = vst.msk [vmem:[#allocation2 + $0x20] sm:$0xff] %vm930, %v891
    %936 = vst.msk [vmem:[#allocation2 + $0x28] sm:$0xff] %vm930, %v893
    %937 = vst.msk [vmem:[#allocation2 + $0x30] sm:$0xff] %vm930, %v895
    %938 = vst.msk [vmem:[#allocation2 + $0x38] sm:$0xff] %vm930, %v897
    %939 = vst.msk [vmem:[#allocation2 + $0x40] sm:$0xff] %vm930, %v899
    %940 = vst.msk [vmem:[#allocation2 + $0x48] sm:$0xff] %vm930, %v901
    %941 = vst.msk [vmem:[#allocation2 + $0x50] sm:$0xff] %vm930, %v903
    %942 = vst.msk [vmem:[#allocation2 + $0x58] sm:$0xff] %vm930, %v905
    %943 = vst.msk [vmem:[#allocation2 + $0x60] sm:$0xff] %vm930, %v907
    %944 = vst.msk [vmem:[#allocation2 + $0x68] sm:$0xff] %vm930, %v909
    %945 = vst.msk [vmem:[#allocation2 + $0x70] sm:$0xff] %vm930, %v911
    %946 = vst.msk [vmem:[#allocation2 + $0x78] sm:$0xff] %vm930, %v913
    %947 = vset.pattern.permute.xlu0 6
    %948 = vperm.xlu0 %947, %v13
    %v949 = vpop.permute.xlu0 %948
    %951 = vset.pattern.permute.xlu0 6
    %952 = vperm.xlu0 %951, %v14
    %v953 = vpop.permute.xlu0 %952
    %955 = vset.pattern.permute.xlu0 6
    %956 = vperm.xlu0 %955, %v15
    %v957 = vpop.permute.xlu0 %956
    %959 = vset.pattern.permute.xlu0 6
    %960 = vperm.xlu0 %959, %v16
    %v961 = vpop.permute.xlu0 %960
    %963 = vset.pattern.permute.xlu0 6
    %964 = vperm.xlu0 %963, %v17
    %v965 = vpop.permute.xlu0 %964
    %967 = vset.pattern.permute.xlu0 6
    %968 = vperm.xlu0 %967, %v18
    %v969 = vpop.permute.xlu0 %968
    %971 = vset.pattern.permute.xlu0 6
    %972 = vperm.xlu0 %971, %v19
    %v973 = vpop.permute.xlu0 %972
    %975 = vset.pattern.permute.xlu0 6
    %976 = vperm.xlu0 %975, %v20
    %v977 = vpop.permute.xlu0 %976
    %979 = vset.pattern.permute.xlu0 6
    %980 = vperm.xlu0 %979, %v21
    %v981 = vpop.permute.xlu0 %980
    %983 = vset.pattern.permute.xlu0 6
    %984 = vperm.xlu0 %983, %v22
    %v985 = vpop.permute.xlu0 %984
    %987 = vset.pattern.permute.xlu0 6
    %988 = vperm.xlu0 %987, %v23
    %v989 = vpop.permute.xlu0 %988
    %991 = vset.pattern.permute.xlu0 6
    %992 = vperm.xlu0 %991, %v24
    %v993 = vpop.permute.xlu0 %992
    %995 = vset.pattern.permute.xlu0 6
    %996 = vperm.xlu0 %995, %v25
    %v997 = vpop.permute.xlu0 %996
    %999 = vset.pattern.permute.xlu0 6
    %1000 = vperm.xlu0 %999, %v26
    %v1001 = vpop.permute.xlu0 %1000
    %1003 = vset.pattern.permute.xlu0 6
    %1004 = vperm.xlu0 %1003, %v27
    %v1005 = vpop.permute.xlu0 %1004
    %1007 = vset.pattern.permute.xlu0 6
    %1008 = vperm.xlu0 %1007, %v28
    %v1009 = vpop.permute.xlu0 %1008
    %v1011 = vmul.f32 %v949, %v13
    %v1012 = vmul.f32 %v953, %v14
    %v1013 = vmul.f32 %v957, %v15
    %v1014 = vmul.f32 %v961, %v16
    %v1015 = vmul.f32 %v965, %v17
    %v1016 = vmul.f32 %v969, %v18
    %v1017 = vmul.f32 %v973, %v19
    %v1018 = vmul.f32 %v977, %v20
    %v1019 = vmul.f32 %v981, %v21
    %v1020 = vmul.f32 %v985, %v22
    %v1021 = vmul.f32 %v989, %v23
    %v1022 = vmul.f32 %v993, %v24
    %v1023 = vmul.f32 %v997, %v25
    %v1024 = vmul.f32 %v1001, %v26
    %v1025 = vmul.f32 %v1005, %v27
    %v1026 = vmul.f32 %v1009, %v28
    %1043 = vrot.lane.b32.xlu0 %v1011, 48
    %v1044 = vpop.permute.xlu0 %1043
    %1045 = vrot.lane.b32.xlu0 %v1012, 48
    %v1046 = vpop.permute.xlu0 %1045
    %1047 = vrot.lane.b32.xlu0 %v1013, 48
    %v1048 = vpop.permute.xlu0 %1047
    %1049 = vrot.lane.b32.xlu0 %v1014, 48
    %v1050 = vpop.permute.xlu0 %1049
    %1051 = vrot.lane.b32.xlu0 %v1015, 48
    %v1052 = vpop.permute.xlu0 %1051
    %1053 = vrot.lane.b32.xlu0 %v1016, 48
    %v1054 = vpop.permute.xlu0 %1053
    %1055 = vrot.lane.b32.xlu0 %v1017, 48
    %v1056 = vpop.permute.xlu0 %1055
    %1057 = vrot.lane.b32.xlu0 %v1018, 48
    %v1058 = vpop.permute.xlu0 %1057
    %1059 = vrot.lane.b32.xlu0 %v1019, 48
    %v1060 = vpop.permute.xlu0 %1059
    %1061 = vrot.lane.b32.xlu0 %v1020, 48
    %v1062 = vpop.permute.xlu0 %1061
    %1063 = vrot.lane.b32.xlu0 %v1021, 48
    %v1064 = vpop.permute.xlu0 %1063
    %1065 = vrot.lane.b32.xlu0 %v1022, 48
    %v1066 = vpop.permute.xlu0 %1065
    %1067 = vrot.lane.b32.xlu0 %v1023, 48
    %v1068 = vpop.permute.xlu0 %1067
    %1069 = vrot.lane.b32.xlu0 %v1024, 48
    %v1070 = vpop.permute.xlu0 %1069
    %1071 = vrot.lane.b32.xlu0 %v1025, 48
    %v1072 = vpop.permute.xlu0 %1071
    %1073 = vrot.lane.b32.xlu0 %v1026, 48
    %v1074 = vpop.permute.xlu0 %1073
    %vm1091 = vcmask 458112
    %1092 = vst.msk [vmem:[#allocation2] sm:$0xff] %vm1091, %v1044
    %1093 = vst.msk [vmem:[#allocation2 + $0x8] sm:$0xff] %vm1091, %v1046
    %1094 = vst.msk [vmem:[#allocation2 + $0x10] sm:$0xff] %vm1091, %v1048
    %1095 = vst.msk [vmem:[#allocation2 + $0x18] sm:$0xff] %vm1091, %v1050
    %1096 = vst.msk [vmem:[#allocation2 + $0x20] sm:$0xff] %vm1091, %v1052
    %1097 = vst.msk [vmem:[#allocation2 + $0x28] sm:$0xff] %vm1091, %v1054
    %1098 = vst.msk [vmem:[#allocation2 + $0x30] sm:$0xff] %vm1091, %v1056
    %1099 = vst.msk [vmem:[#allocation2 + $0x38] sm:$0xff] %vm1091, %v1058
    %1100 = vst.msk [vmem:[#allocation2 + $0x40] sm:$0xff] %vm1091, %v1060
    %1101 = vst.msk [vmem:[#allocation2 + $0x48] sm:$0xff] %vm1091, %v1062
    %1102 = vst.msk [vmem:[#allocation2 + $0x50] sm:$0xff] %vm1091, %v1064
    %1103 = vst.msk [vmem:[#allocation2 + $0x58] sm:$0xff] %vm1091, %v1066
    %1104 = vst.msk [vmem:[#allocation2 + $0x60] sm:$0xff] %vm1091, %v1068
    %1105 = vst.msk [vmem:[#allocation2 + $0x68] sm:$0xff] %vm1091, %v1070
    %1106 = vst.msk [vmem:[#allocation2 + $0x70] sm:$0xff] %vm1091, %v1072
    %1107 = vst.msk [vmem:[#allocation2 + $0x78] sm:$0xff] %vm1091, %v1074
    %1108 = vset.pattern.permute.xlu0 7
    %1109 = vperm.xlu0 %1108, %v13
    %v1110 = vpop.permute.xlu0 %1109
    %1112 = vset.pattern.permute.xlu0 7
    %1113 = vperm.xlu0 %1112, %v14
    %v1114 = vpop.permute.xlu0 %1113
    %1116 = vset.pattern.permute.xlu0 7
    %1117 = vperm.xlu0 %1116, %v15
    %v1118 = vpop.permute.xlu0 %1117
    %1120 = vset.pattern.permute.xlu0 7
    %1121 = vperm.xlu0 %1120, %v16
    %v1122 = vpop.permute.xlu0 %1121
    %1124 = vset.pattern.permute.xlu0 7
    %1125 = vperm.xlu0 %1124, %v17
    %v1126 = vpop.permute.xlu0 %1125
    %1128 = vset.pattern.permute.xlu0 7
    %1129 = vperm.xlu0 %1128, %v18
    %v1130 = vpop.permute.xlu0 %1129
    %1132 = vset.pattern.permute.xlu0 7
    %1133 = vperm.xlu0 %1132, %v19
    %v1134 = vpop.permute.xlu0 %1133
    %1136 = vset.pattern.permute.xlu0 7
    %1137 = vperm.xlu0 %1136, %v20
    %v1138 = vpop.permute.xlu0 %1137
    %1140 = vset.pattern.permute.xlu0 7
    %1141 = vperm.xlu0 %1140, %v21
    %v1142 = vpop.permute.xlu0 %1141
    %1144 = vset.pattern.permute.xlu0 7
    %1145 = vperm.xlu0 %1144, %v22
    %v1146 = vpop.permute.xlu0 %1145
    %1148 = vset.pattern.permute.xlu0 7
    %1149 = vperm.xlu0 %1148, %v23
    %v1150 = vpop.permute.xlu0 %1149
    %1152 = vset.pattern.permute.xlu0 7
    %1153 = vperm.xlu0 %1152, %v24
    %v1154 = vpop.permute.xlu0 %1153
    %1156 = vset.pattern.permute.xlu0 7
    %1157 = vperm.xlu0 %1156, %v25
    %v1158 = vpop.permute.xlu0 %1157
    %1160 = vset.pattern.permute.xlu0 7
    %1161 = vperm.xlu0 %1160, %v26
    %v1162 = vpop.permute.xlu0 %1161
    %1164 = vset.pattern.permute.xlu0 7
    %1165 = vperm.xlu0 %1164, %v27
    %v1166 = vpop.permute.xlu0 %1165
    %1168 = vset.pattern.permute.xlu0 7
    %1169 = vperm.xlu0 %1168, %v28
    %v1170 = vpop.permute.xlu0 %1169
    %v1172 = vmul.f32 %v1110, %v13
    %v1173 = vmul.f32 %v1114, %v14
    %v1174 = vmul.f32 %v1118, %v15
    %v1175 = vmul.f32 %v1122, %v16
    %v1176 = vmul.f32 %v1126, %v17
    %v1177 = vmul.f32 %v1130, %v18
    %v1178 = vmul.f32 %v1134, %v19
    %v1179 = vmul.f32 %v1138, %v20
    %v1180 = vmul.f32 %v1142, %v21
    %v1181 = vmul.f32 %v1146, %v22
    %v1182 = vmul.f32 %v1150, %v23
    %v1183 = vmul.f32 %v1154, %v24
    %v1184 = vmul.f32 %v1158, %v25
    %v1185 = vmul.f32 %v1162, %v26
    %v1186 = vmul.f32 %v1166, %v27
    %v1187 = vmul.f32 %v1170, %v28
    %1204 = vrot.lane.b32.xlu0 %v1172, 56
    %v1205 = vpop.permute.xlu0 %1204
    %1206 = vrot.lane.b32.xlu0 %v1173, 56
    %v1207 = vpop.permute.xlu0 %1206
    %1208 = vrot.lane.b32.xlu0 %v1174, 56
    %v1209 = vpop.permute.xlu0 %1208
    %1210 = vrot.lane.b32.xlu0 %v1175, 56
    %v1211 = vpop.permute.xlu0 %1210
    %1212 = vrot.lane.b32.xlu0 %v1176, 56
    %v1213 = vpop.permute.xlu0 %1212
    %1214 = vrot.lane.b32.xlu0 %v1177, 56
    %v1215 = vpop.permute.xlu0 %1214
    %1216 = vrot.lane.b32.xlu0 %v1178, 56
    %v1217 = vpop.permute.xlu0 %1216
    %1218 = vrot.lane.b32.xlu0 %v1179, 56
    %v1219 = vpop.permute.xlu0 %1218
    %1220 = vrot.lane.b32.xlu0 %v1180, 56
    %v1221 = vpop.permute.xlu0 %1220
    %1222 = vrot.lane.b32.xlu0 %v1181, 56
    %v1223 = vpop.permute.xlu0 %1222
    %1224 = vrot.lane.b32.xlu0 %v1182, 56
    %v1225 = vpop.permute.xlu0 %1224
    %1226 = vrot.lane.b32.xlu0 %v1183, 56
    %v1227 = vpop.permute.xlu0 %1226
    %1228 = vrot.lane.b32.xlu0 %v1184, 56
    %v1229 = vpop.permute.xlu0 %1228
    %1230 = vrot.lane.b32.xlu0 %v1185, 56
    %v1231 = vpop.permute.xlu0 %1230
    %1232 = vrot.lane.b32.xlu0 %v1186, 56
    %v1233 = vpop.permute.xlu0 %1232
    %1234 = vrot.lane.b32.xlu0 %v1187, 56
    %v1235 = vpop.permute.xlu0 %1234
    %vm1252 = vcmask 523712
    %1253 = vst.msk [vmem:[#allocation2] sm:$0xff] %vm1252, %v1205
    %1254 = vst.msk [vmem:[#allocation2 + $0x8] sm:$0xff] %vm1252, %v1207
    %1255 = vst.msk [vmem:[#allocation2 + $0x10] sm:$0xff] %vm1252, %v1209
    %1256 = vst.msk [vmem:[#allocation2 + $0x18] sm:$0xff] %vm1252, %v1211
    %1257 = vst.msk [vmem:[#allocation2 + $0x20] sm:$0xff] %vm1252, %v1213
    %1258 = vst.msk [vmem:[#allocation2 + $0x28] sm:$0xff] %vm1252, %v1215
    %1259 = vst.msk [vmem:[#allocation2 + $0x30] sm:$0xff] %vm1252, %v1217
    %1260 = vst.msk [vmem:[#allocation2 + $0x38] sm:$0xff] %vm1252, %v1219
    %1261 = vst.msk [vmem:[#allocation2 + $0x40] sm:$0xff] %vm1252, %v1221
    %1262 = vst.msk [vmem:[#allocation2 + $0x48] sm:$0xff] %vm1252, %v1223
    %1263 = vst.msk [vmem:[#allocation2 + $0x50] sm:$0xff] %vm1252, %v1225
    %1264 = vst.msk [vmem:[#allocation2 + $0x58] sm:$0xff] %vm1252, %v1227
    %1265 = vst.msk [vmem:[#allocation2 + $0x60] sm:$0xff] %vm1252, %v1229
    %1266 = vst.msk [vmem:[#allocation2 + $0x68] sm:$0xff] %vm1252, %v1231
    %1267 = vst.msk [vmem:[#allocation2 + $0x70] sm:$0xff] %vm1252, %v1233
    %1268 = vst.msk [vmem:[#allocation2 + $0x78] sm:$0xff] %vm1252, %v1235
    %v1269 = vld [vmem:[#allocation2] sm:$0xff]
    %v1270 = vld [vmem:[#allocation2 + $0x8] sm:$0xff]
    %v1271 = vld [vmem:[#allocation2 + $0x10] sm:$0xff]
    %v1272 = vld [vmem:[#allocation2 + $0x18] sm:$0xff]
    %v1273 = vld [vmem:[#allocation2 + $0x20] sm:$0xff]
    %v1274 = vld [vmem:[#allocation2 + $0x28] sm:$0xff]
    %v1275 = vld [vmem:[#allocation2 + $0x30] sm:$0xff]
    %v1276 = vld [vmem:[#allocation2 + $0x38] sm:$0xff]
    %v1277 = vld [vmem:[#allocation2 + $0x40] sm:$0xff]
    %v1278 = vld [vmem:[#allocation2 + $0x48] sm:$0xff]
    %v1279 = vld [vmem:[#allocation2 + $0x50] sm:$0xff]
    %v1280 = vld [vmem:[#allocation2 + $0x58] sm:$0xff]
    %v1281 = vld [vmem:[#allocation2 + $0x60] sm:$0xff]
    %v1282 = vld [vmem:[#allocation2 + $0x68] sm:$0xff]
    %v1283 = vld [vmem:[#allocation2 + $0x70] sm:$0xff]
    %v1284 = vld [vmem:[#allocation2 + $0x78] sm:$0xff]
    %v1285 = vpack.c.bf16 %v1270, %v1269
    %v1286 = vpack.c.bf16 %v1272, %v1271
    %v1287 = vpack.c.bf16 %v1274, %v1273
    %v1288 = vpack.c.bf16 %v1276, %v1275
    %v1289 = vpack.c.bf16 %v1278, %v1277
    %v1290 = vpack.c.bf16 %v1280, %v1279
    %v1291 = vpack.c.bf16 %v1282, %v1281
    %v1292 = vpack.c.bf16 %v1284, %v1283
    %v1293 = vld [vmem:[%s1] sm:$0xf]
    %v1294 = vld [vmem:[%s1 + $0x4] sm:$0xf]
    %v1295 = vld [vmem:[%s1 + $0x8] sm:$0xf]
    %v1296 = vld [vmem:[%s1 + $0xc] sm:$0xf]
    %v1297 = vld [vmem:[%s1 + $0x10] sm:$0xf]
    %v1298 = vld [vmem:[%s1 + $0x14] sm:$0xf]
    %v1299 = vld [vmem:[%s1 + $0x18] sm:$0xf]
    %v1300 = vld [vmem:[%s1 + $0x1c] sm:$0xf]
    %v1309 = vunpack.c.l.b16 %v1293
    %v1310 = vunpack.c.l.b16 %v1294
    %v1311 = vunpack.c.l.b16 %v1295
    %v1312 = vunpack.c.l.b16 %v1296
    %v1313 = vunpack.c.l.b16 %v1297
    %v1314 = vunpack.c.l.b16 %v1298
    %v1315 = vunpack.c.l.b16 %v1299
    %v1316 = vunpack.c.l.b16 %v1300
    %v1317 = vpack.c.b16 %v1310, %v1309
    %v1318 = vpack.c.b16 %v1312, %v1311
    %v1319 = vpack.c.b16 %v1314, %v1313
    %v1320 = vpack.c.b16 %v1316, %v1315
    %vm1325 = vcmask 523264
    %v1327 = vsel %vm1325, %v1285, 0
    %v1330 = vsel %vm1325, %v1286, 0
    %v1333 = vsel %vm1325, %v1287, 0
    %v1336 = vsel %vm1325, %v1288, 0
    %v1339 = vsel %vm1325, %v1289, 0
    %v1342 = vsel %vm1325, %v1290, 0
    %v1345 = vsel %vm1325, %v1291, 0
    %v1348 = vsel %vm1325, %v1292, 0
    %1350 = vmatprep.subr.bf16.mxu0 0
    %1351 = vmatpush1.bf16.msra.mxu0 0
    %1352 = vmatprep.subr.bf16.mxu0 0
    %1353 = vmatpush1.bf16.msra.mxu0 0
    %1354 = vmatprep.subr.bf16.mxu0 0
    %1355 = vmatpush1.bf16.msra.mxu0 0
    %1356 = vmatprep.subr.bf16.mxu0 0
    %1357 = vmatpush1.bf16.msra.mxu0 0
    %1358 = vmatprep.subr.bf16.mxu0 0
    %1359 = vmatpush1.bf16.msra.mxu0 %v1320
    %1360 = vmatprep.subr.bf16.mxu0 0
    %1361 = vmatpush1.bf16.msra.mxu0 %v1319
    %1362 = vmatprep.subr.bf16.mxu0 0
    %1363 = vmatpush1.bf16.msra.mxu0 %v1318
    %1364 = vmatprep.subr.bf16.mxu0 0
    %1365 = vmatpush1.bf16.msra.mxu0 %v1317
    %1366 = vmatprep.subr.bf16.mxu0 0
    %1367 = vmatpush2.bf16.msra.mxu0 0
    %1368 = vmatprep.subr.bf16.mxu0 0
    %1369 = vmatpush2.bf16.msra.mxu0 0
    %1370 = vmatprep.subr.bf16.mxu0 0
    %1371 = vmatpush2.bf16.msra.mxu0 0
    %1372 = vmatprep.subr.bf16.mxu0 0
    %1373 = vmatpush2.bf16.msra.mxu0 0
    %1374 = vmatprep.subr.bf16.mxu0 0
    %1375 = vmatpush2.bf16.msra.mxu0 0
    %1376 = vmatprep.subr.bf16.mxu0 0
    %1377 = vmatpush2.bf16.msra.mxu0 0
    %1378 = vmatprep.subr.bf16.mxu0 0
    %1379 = vmatpush2.bf16.msra.mxu0 0
    %1380 = vmatprep.subr.bf16.mxu0 0
    %1381 = vmatpush2.bf16.msra.mxu0 0
    %1382 = vmatprep.mubr.bf16.mxu0 0
    %1383 = vmatmul.mubr.bf16.gmra.mxu0 %v1327
    %v1384 = vpop.f32.mrf.mxu0
    %v1385 = vadd.f32 0.0, %v1384
    %v1386 = vpop.f32.mrf.mxu0
    %v1387 = vpop.f32.mrf.mxu0
    %v1388 = vadd.f32 0.0, %v1387
    %v1389 = vpop.f32.mrf.mxu0
    %1390 = vmatprep.mubr.bf16.mxu0 0
    %1391 = vmatmul.mubr.bf16.gmra.mxu0 %v1330
    %v1392 = vpop.f32.mrf.mxu0
    %v1393 = vadd.f32 0.0, %v1392
    %v1394 = vpop.f32.mrf.mxu0
    %v1395 = vpop.f32.mrf.mxu0
    %v1396 = vadd.f32 0.0, %v1395
    %v1397 = vpop.f32.mrf.mxu0
    %1398 = vmatprep.mubr.bf16.mxu0 0
    %1399 = vmatmul.mubr.bf16.gmra.mxu0 %v1333
    %v1400 = vpop.f32.mrf.mxu0
    %v1401 = vadd.f32 0.0, %v1400
    %v1402 = vpop.f32.mrf.mxu0
    %v1403 = vpop.f32.mrf.mxu0
    %v1404 = vadd.f32 0.0, %v1403
    %v1405 = vpop.f32.mrf.mxu0
    %1406 = vmatprep.mubr.bf16.mxu0 0
    %1407 = vmatmul.mubr.bf16.gmra.mxu0 %v1336
    %v1408 = vpop.f32.mrf.mxu0
    %v1409 = vadd.f32 0.0, %v1408
    %v1410 = vpop.f32.mrf.mxu0
    %v1411 = vpop.f32.mrf.mxu0
    %v1412 = vadd.f32 0.0, %v1411
    %v1413 = vpop.f32.mrf.mxu0
    %1414 = vmatprep.mubr.bf16.mxu0 0
    %1415 = vmatmul.mubr.bf16.gmra.mxu0 %v1339
    %v1416 = vpop.f32.mrf.mxu0
    %v1417 = vadd.f32 0.0, %v1416
    %v1418 = vpop.f32.mrf.mxu0
    %v1419 = vpop.f32.mrf.mxu0
    %v1420 = vadd.f32 0.0, %v1419
    %v1421 = vpop.f32.mrf.mxu0
    %1422 = vmatprep.mubr.bf16.mxu0 0
    %1423 = vmatmul.mubr.bf16.gmra.mxu0 %v1342
    %v1424 = vpop.f32.mrf.mxu0
    %v1425 = vadd.f32 0.0, %v1424
    %v1426 = vpop.f32.mrf.mxu0
    %v1427 = vpop.f32.mrf.mxu0
    %v1428 = vadd.f32 0.0, %v1427
    %v1429 = vpop.f32.mrf.mxu0
    %1430 = vmatprep.mubr.bf16.mxu0 0
    %1431 = vmatmul.mubr.bf16.gmra.mxu0 %v1345
    %v1432 = vpop.f32.mrf.mxu0
    %v1433 = vadd.f32 0.0, %v1432
    %v1434 = vpop.f32.mrf.mxu0
    %v1435 = vpop.f32.mrf.mxu0
    %v1436 = vadd.f32 0.0, %v1435
    %v1437 = vpop.f32.mrf.mxu0
    %1438 = vmatprep.mubr.bf16.mxu0 0
    %1439 = vmatmul.mubr.bf16.gmra.mxu0 %v1348
    %v1440 = vpop.f32.mrf.mxu0
    %v1441 = vadd.f32 0.0, %v1440
    %v1442 = vpop.f32.mrf.mxu0
    %v1443 = vpop.f32.mrf.mxu0
    %v1444 = vadd.f32 0.0, %v1443
    %v1445 = vpop.f32.mrf.mxu0
    %1446 = vdwg.mxu0
    %1447 = vst [vmem:[#allocation3] sm:$0xff] %v1385
    %1448 = vst [vmem:[#allocation3 + $0x8] sm:$0xff] %v1388
    %1449 = vst [vmem:[#allocation3 + $0x10] sm:$0xff] %v1393
    %1450 = vst [vmem:[#allocation3 + $0x18] sm:$0xff] %v1396
    %1451 = vst [vmem:[#allocation3 + $0x20] sm:$0xff] %v1401
    %1452 = vst [vmem:[#allocation3 + $0x28] sm:$0xff] %v1404
    %1453 = vst [vmem:[#allocation3 + $0x30] sm:$0xff] %v1409
    %1454 = vst [vmem:[#allocation3 + $0x38] sm:$0xff] %v1412
    %1455 = vst [vmem:[#allocation3 + $0x40] sm:$0xff] %v1417
    %1456 = vst [vmem:[#allocation3 + $0x48] sm:$0xff] %v1420
    %1457 = vst [vmem:[#allocation3 + $0x50] sm:$0xff] %v1425
    %1458 = vst [vmem:[#allocation3 + $0x58] sm:$0xff] %v1428
    %1459 = vst [vmem:[#allocation3 + $0x60] sm:$0xff] %v1433
    %1460 = vst [vmem:[#allocation3 + $0x68] sm:$0xff] %v1436
    %1461 = vst [vmem:[#allocation3 + $0x70] sm:$0xff] %v1441
    %1462 = vst [vmem:[#allocation3 + $0x78] sm:$0xff] %v1444
    // Predicated region
    $region10: #{tpu_custom_call.1} parent=1 // pred_check
      _
    $region11: #{tpu_custom_call.1} parent=1 // pred_check_branch
      %1464 = sbr.rel (0) target = $region13
    $region12: #{tpu_custom_call.1} parent=1 // pred_region
      %s1466 = ssub.s32 2048, 2048
      %1467 = vsyncadd [#allocation4], %s1466
      %s1468 = sshll.u32 [#allocation3], 4
      %s1469 = int_to_ptr.vmem [resolvable:$true] %s1468
      %1474 = dma.vmem_to_hbm [thread:$0]  %s1469, 2048, %s2, [#allocation4], 128, 128, 8
    $region13: #{tpu_custom_call.1} parent=1 // pred_fallthru
      _
    // Predicated region
    $region14: #{tpu_custom_call.1} parent=1 // pred_check
      _
    $region15: #{tpu_custom_call.1} parent=1 // pred_check_branch
      %1476 = sbr.rel (0) target = $region17
    $region16: #{tpu_custom_call.1} parent=1 // pred_region
      %1477 = dma.done [#allocation4], 2048
    $region17: #{tpu_custom_call.1} parent=1 // pred_fallthru
      _
    %1478 = vsyncpa [#allocation4], 1

</llo_original>
